<compile_context>
chip_gen: v5e
topology: v5e:2x2
jax: 0.10.0
libtpu: 0.0.40
codegen_flags: <defaults>
</compile_context>

<pallas_src>
import jax
import jax.numpy as jnp
from jax.experimental import pallas as pl
from jax.experimental.pallas import tpu as pltpu


def _row_nll(x_nat, t_nat):
    """Per-row -sum_c t[b,c]*log_softmax(x)[b,c] as a (blk,1) f32 column.

    Returns (loss_col, t_f32); t_f32 is reused by the weighted variant.
    """
    # Row max in the native dtype (bf16 vregs hold 16x128 -> half the XLU
    # reduce work on v6e/v7x); cast to f32 only for the shifted logits.
    m = jnp.max(x_nat, axis=-1, keepdims=True).astype(jnp.float32)
    s = x_nat.astype(jnp.float32) - m                               # (blk, C) f32
    lse = jnp.log(jnp.sum(jnp.exp(s), axis=-1, keepdims=True))      # (blk, 1)
    t32 = t_nat.astype(jnp.float32)
    sum_t = jnp.sum(t32, axis=-1, keepdims=True)                    # (blk, 1)
    st_s = jnp.sum(t32 * s, axis=-1, keepdims=True)                 # (blk, 1)
    return sum_t * lse - st_s, t32


def _soft_ce_kernel(x_ref, t_ref, o_ref):
    loss, _ = _row_nll(x_ref[...], t_ref[...])
    # Lane-dense write: (blk,1) column -> (1,blk) row (XLU transpose, free slot).
    o_ref[...] = jnp.transpose(loss).astype(o_ref.dtype)


def _soft_ce_weighted_kernel(x_ref, t_ref, w_ref, o_ref):
    loss, t32 = _row_nll(x_ref[...], t_ref[...])
    w = w_ref[...].astype(jnp.float32)                              # (1, C)
    sample_w = jnp.sum(t32 * w, axis=-1, keepdims=True)             # (blk, 1)
    o_ref[...] = jnp.transpose(loss * sample_w).astype(o_ref.dtype)


def _round_up(n, m):
    return -(-n // m) * m


def _vmem_capacity_bytes():
    # NOTE: assumed to report per-TensorCore VMEM (64 MiB on v7x); budgets below
    # keep >=15% headroom in case of over-reporting / internal scratch.
    try:
        return int(pltpu.get_tpu_info().vmem_capacity_bytes)
    except Exception:
        return 64 << 20  # conservative default (v7x has 64 MiB per TC)


def _pick_block_b(B, C, x_dtype, t_dtype):
    """Largest row tile such that the double-buffered inputs *plus* the f32
    elementwise temporaries fit in ~60% of VMEM; capped at 512 rows and forced
    to produce >=2 grid steps when the batch allows it."""
    x_isz = jnp.dtype(x_dtype).itemsize
    t_isz = jnp.dtype(t_dtype).itemsize
    packing = max(8, 32 // min(x_isz, t_isz))      # 8 for f32, 16 for bf16, ...
    cap = _vmem_capacity_bytes()
    # 2 pipeline buffers per input (native dtype) + ~4 f32 full-tile temps
    # (s, exp(s), t_f32, t*s) live at the elementwise-body peak.
    per_row = 2 * C * (x_isz + t_isz) + 4 * C * 4
    blk = max(packing, int(cap * 0.6) // max(per_row, 1))
    blk = min(blk, 512)                            # 512-row tiles ~85% of roofline
    if B >= 2 * packing:                           # >=2 blocks: keep 2nd TC busy
        blk = min(blk, _round_up(pl.cdiv(B, 2), packing))
    blk = min(blk, _round_up(B, packing))
    if blk >= 128:
        blk = (blk // 128) * 128                   # unmasked vst on lane-dense out
    else:
        blk = max(packing, (blk // packing) * packing)
    return blk, packing


def soft_target_cross_entropy(x, target, weight=None, apply_class_weights=False,
                              block_b=None):
    """
    x:      [B, C] logits
    target: [B, C] soft distribution
    weight: optional [C] class weights (used iff apply_class_weights)
    Returns per-sample loss of shape [B] (float32).
    """
    B, C = x.shape
    assert target.shape == (B, C)

    blk, packing = _pick_block_b(B, C, x.dtype, target.dtype)
    if block_b is not None:
        blk = max(packing, _round_up(min(block_b, _round_up(B, packing)), packing))

    nb = pl.cdiv(B, blk)
    grid = (nb,)
    x_spec = pl.BlockSpec((blk, C), lambda i: (i, 0))
    t_spec = pl.BlockSpec((blk, C), lambda i: (i, 0))
    # Lane-dense output: one (1, blk) row per grid step.
    o_spec = pl.BlockSpec((1, blk), lambda i: (i, 0))
    out_shape = jax.ShapeDtypeStruct((nb, blk), jnp.float32)

    x_isz = jnp.dtype(x.dtype).itemsize
    t_isz = jnp.dtype(target.dtype).itemsize
    Cp = _round_up(C, 128)
    blk_l = _round_up(blk, 128)
    cap = _vmem_capacity_bytes()
    vmem_needed = (2 * blk * Cp * x_isz            # x DMA, double-buffered
                   + 2 * blk * Cp * t_isz          # target DMA, double-buffered
                   + 4 * blk * Cp * 4              # f32 temps: s, exp(s), t32, t*s
                   + 2 * 8 * blk_l * 4             # (1, blk) output, double-buffered
                   + 2 * 8 * Cp * 4                # (1, C) class-weight row
                   + (2 << 20))                    # slack
    vmem_limit = int(min(int(cap * 0.85), max(32 << 20, vmem_needed)))
    cparams = pltpu.CompilerParams(
        dimension_semantics=("parallel",),
        vmem_limit_bytes=vmem_limit,
    )

    use_w = (weight is not None) and apply_class_weights
    if use_w:
        w2d = jnp.asarray(weight, jnp.float32).reshape(1, C)
        w_spec = pl.BlockSpec((1, C), lambda i: (0, 0))
        out2d = pl.pallas_call(
            _soft_ce_weighted_kernel,
            out_shape=out_shape,
            grid_spec=pltpu.PrefetchScalarGridSpec(
                num_scalar_prefetch=0,
                grid=grid,
                in_specs=[x_spec, t_spec, w_spec],
                out_specs=o_spec,
            ),
            compiler_params=cparams,
        )(x, target, w2d)
    else:
        out2d = pl.pallas_call(
            _soft_ce_kernel,
            out_shape=out_shape,
            grid_spec=pltpu.PrefetchScalarGridSpec(
                num_scalar_prefetch=0,
                grid=grid,
                in_specs=[x_spec, t_spec],
                out_specs=o_spec,
            ),
            compiler_params=cparams,
        )(x, target)

    # (nb, blk) row-major == batch order; drop the ragged tail.
    return out2d.reshape(-1)[:B]


def _reference(x, target, weight=None, apply_class_weights=False):
    log_probs = jax.nn.log_softmax(x.astype(jnp.float32), axis=-1)
    loss = -(target.astype(jnp.float32) * log_probs).sum(axis=1)
    if weight is not None and apply_class_weights:
        sw = (target.astype(jnp.float32) * weight[None, :]).sum(axis=1)
        loss = loss * sw
    return loss


if __name__ == "__main__":
    key = jax.random.PRNGKey(0)
    kx, kt, kx2, kt2 = jax.random.split(key, 4)

    # Small shapes consistent with the module: [B, C] logits + soft targets.
    B, C = 8, 32
    x = jax.random.normal(kx, (B, C), dtype=jnp.float32)
    target = jax.nn.softmax(jax.random.normal(kt, (B, C), dtype=jnp.float32), axis=-1)
    weight = 0.5 + jnp.arange(C, dtype=jnp.float32) / C

    # Unweighted path.
    out = jax.block_until_ready(soft_target_cross_entropy(x, target))
    ref = _reference(x, target)
    assert out.shape == (B,)
    assert jnp.allclose(out, ref, atol=1e-5, rtol=1e-5), (out, ref)

    # Weighted path (apply_class_weights=True).
    out_w = jax.block_until_ready(
        soft_target_cross_entropy(x, target, weight=weight, apply_class_weights=True))
    ref_w = _reference(x, target, weight=weight, apply_class_weights=True)
    assert out_w.shape == (B,)
    assert jnp.allclose(out_w, ref_w, atol=1e-5, rtol=1e-5), (out_w, ref_w)

    # Ragged batch (B not a multiple of the tile) + bf16 inputs: exercises the
    # no-pad cdiv grid, the lane-dense (nb, blk) output with a discarded tail,
    # native-dtype max, and the in-kernel f32 cast.
    B2, C2 = 37, 160
    x2 = jax.random.normal(kx2, (B2, C2), dtype=jnp.float32).astype(jnp.bfloat16)
    t2 = jax.nn.softmax(
        jax.random.normal(kt2, (B2, C2), dtype=jnp.float32), axis=-1
    ).astype(jnp.bfloat16)
    out2 = jax.block_until_ready(soft_target_cross_entropy(x2, t2, block_b=16))
    ref2 = _reference(x2.astype(jnp.float32), t2.astype(jnp.float32))
    assert out2.shape == (B2,)
    assert jnp.allclose(out2, ref2, atol=2e-2, rtol=2e-2), (out2, ref2)

    # Auto-picked tile on the ragged batch (no override) — also covers the
    # ">=2 grid steps" path of the tile chooser.
    out3 = jax.block_until_ready(soft_target_cross_entropy(x2, t2))
    assert out3.shape == (B2,)
    assert jnp.allclose(out3, ref2, atol=2e-2, rtol=2e-2), (out3, ref2)

    print("KERNEL_OK")
</pallas_src>

<mosaic_0001>
module attributes {stable_mosaic.version = 11 : i64} {
  func.func @_soft_ce_kernel(%arg0: i32, %arg1: memref<8x32xf32, #tpu.memory_space<vmem>>, %arg2: memref<8x32xf32, #tpu.memory_space<vmem>>, %arg3: memref<1x8xf32, #tpu.memory_space<vmem>>) attributes {dimension_semantics = [#tpu.dimension_semantics<parallel>], iteration_bounds = array<i64: 1>, scalar_prefetch = 0 : i64, scratch_operands = 0 : i64, tpu.core_type = #tpu.core_type<tc>, window_params = [{transform_indices = @transform_0, window_bounds = array<i64: 8, 32>}, {transform_indices = @transform_1, window_bounds = array<i64: 8, 32>}, {transform_indices = @transform_2, window_bounds = array<i64: 1, 8>}]} {
    %c0 = arith.constant 0 : index
    %c0_0 = arith.constant 0 : index
    %0 = vector.load %arg1[%c0, %c0_0] : memref<8x32xf32, #tpu.memory_space<vmem>>, vector<8x32xf32>
    %c0_1 = arith.constant 0 : index
    %c0_2 = arith.constant 0 : index
    %1 = vector.load %arg2[%c0_1, %c0_2] : memref<8x32xf32, #tpu.memory_space<vmem>>, vector<8x32xf32>
    %cst = arith.constant dense<0xFF800000> : vector<8xf32>
    %2 = vector.multi_reduction <maximumf>, %0, %cst [1] : vector<8x32xf32> to vector<8xf32>
    %3 = vector.shape_cast %2 : vector<8xf32> to vector<8x1xf32>
    %4 = vector.broadcast %3 : vector<8x1xf32> to vector<8x32xf32>
    %5 = arith.subf %0, %4 : vector<8x32xf32>
    %6 = math.exp %5 : vector<8x32xf32>
    %cst_3 = arith.constant dense<0.000000e+00> : vector<8xf32>
    %7 = vector.multi_reduction <add>, %6, %cst_3 [1] : vector<8x32xf32> to vector<8xf32>
    %8 = vector.shape_cast %7 : vector<8xf32> to vector<8x1xf32>
    %9 = math.log %8 : vector<8x1xf32>
    %cst_4 = arith.constant dense<0.000000e+00> : vector<8xf32>
    %10 = vector.multi_reduction <add>, %1, %cst_4 [1] : vector<8x32xf32> to vector<8xf32>
    %11 = vector.shape_cast %10 : vector<8xf32> to vector<8x1xf32>
    %12 = arith.mulf %1, %5 : vector<8x32xf32>
    %cst_5 = arith.constant dense<0.000000e+00> : vector<8xf32>
    %13 = vector.multi_reduction <add>, %12, %cst_5 [1] : vector<8x32xf32> to vector<8xf32>
    %14 = vector.shape_cast %13 : vector<8xf32> to vector<8x1xf32>
    %15 = arith.mulf %11, %9 : vector<8x1xf32>
    %16 = arith.subf %15, %14 : vector<8x1xf32>
    %17 = tpu.transpose %16, [1, 0] : vector<8x1xf32> -> vector<1x8xf32>
    %c0_6 = arith.constant 0 : index
    %c0_7 = arith.constant 0 : index
    %18 = vector.load %arg3[%c0_6, %c0_7] : memref<1x8xf32, #tpu.memory_space<vmem>>, vector<1x8xf32>
    tpu.vector_store %arg3[%c0_6, %c0_7], %17 {strides = array<i32>} : memref<1x8xf32, #tpu.memory_space<vmem>>, vector<1x8xf32>,
    return
  }
  func.func @transform_0(%arg0: i32) -> (i32, i32) {
    %c0_i32 = arith.constant 0 : i32
    %c0_i32_0 = arith.constant 0 : i32
    return %arg0, %c0_i32 : i32, i32
  }
  func.func @transform_1(%arg0: i32) -> (i32, i32) {
    %c0_i32 = arith.constant 0 : i32
    %c0_i32_0 = arith.constant 0 : i32
    return %arg0, %c0_i32 : i32, i32
  }
  func.func @transform_2(%arg0: i32) -> (i32, i32) {
    %c0_i32 = arith.constant 0 : i32
    %c0_i32_0 = arith.constant 0 : i32
    return %arg0, %c0_i32 : i32, i32
  }
}

</mosaic_0001>

<llo_original>
// kernel: tpu_custom_call.1
$region0: #{tpu_custom_call.1}
  #allocation0 [shape = 'u32[]', space=smem, size = 0x4, offset = 0x4, fixed_abs, tag = 'smem constant byte address 0x4 - core index']
  #allocation1 [shape = 'u32[72,128]{1,0:T(1,128)}', space=vmem, size = 0x9000, scoped, tag = 'internal scratch']
  %s0 = inlined_call_operand.hbm [shape: f32[8,32], index: 0, kind: input, shape index: {}]
  %s1 = inlined_call_operand.hbm [shape: f32[8,32], index: 1, kind: input, shape index: {}]
  %s2 = inlined_call_operand.hbm [shape: f32[1,8], index: 2, kind: output, shape index: {}]
  %s3 = sld [smem:[#allocation0]]
  $region26: #{tpu_custom_call.1} parent=0
    _
  %s5 = ssub.s32 1, %s3
  %s6 = scalar_select 0, %s5, %s3
  $region1: #{tpu_custom_call.1} parent=0
    #allocation2 [shape = 'u8[4096]{0}', space=vmem, size = 0x1000, scoped, tag = 'input window, operand 0, single buffered']
    #allocation3 [shape = 's32[1]{0}', space=sflag, size = 0x4, scoped, tag = 'scoped memory for tpu_custom_call.1']
    #allocation4 [shape = 's32[1]{0}', space=sflag, size = 0x4, scoped, tag = 'scoped memory for tpu_custom_call.1']
    #allocation5 [shape = 'u8[4096]{0}', space=vmem, size = 0x1000, scoped, tag = 'input window, operand 1, single buffered']
    #allocation6 [shape = 's32[1]{0}', space=sflag, size = 0x4, scoped, tag = 'scoped memory for tpu_custom_call.1']
    #allocation7 [shape = 'u8[512]{0}', space=vmem, size = 0x400, scoped, tag = 'output window, operand 0, single buffered']
    %7 = vsyncpa [#allocation3], 0
    %8 = vsyncpa [#allocation6], 0
    %9 = vsyncpa [#allocation4], 0
    // Predicated region
    $region2: #{tpu_custom_call.1} parent=1 // pred_check
      _
    $region3: #{tpu_custom_call.1} parent=1 // pred_check_branch
      %11 = sbr.rel (0) target = $region5
    $region4: #{tpu_custom_call.1} parent=1 // pred_region
      %13 = vsyncadd [#allocation3], 0
      %s15 = sshll.u32 %s0, 4
      %s16 = int_to_ptr.hbm [resolvable:$true] %s15
      %s17 = sshll.u32 [#allocation2], 4
      %s18 = int_to_ptr.vmem [resolvable:$true] %s17
      %20 = dma.hbm_to_vmem [thread:$0]  %s16, 128, %s18, [#allocation3]
    $region5: #{tpu_custom_call.1} parent=1 // pred_fallthru
      _
    // Predicated region
    $region6: #{tpu_custom_call.1} parent=1 // pred_check
      _
    $region7: #{tpu_custom_call.1} parent=1 // pred_check_branch
      %22 = sbr.rel (0) target = $region9
    $region8: #{tpu_custom_call.1} parent=1 // pred_region
      %24 = vsyncadd [#allocation6], 0
      %s26 = sshll.u32 %s1, 4
      %s27 = int_to_ptr.hbm [resolvable:$true] %s26
      %s28 = sshll.u32 [#allocation5], 4
      %s29 = int_to_ptr.vmem [resolvable:$true] %s28
      %31 = dma.hbm_to_vmem [thread:$0]  %s27, 128, %s29, [#allocation6]
    $region9: #{tpu_custom_call.1} parent=1 // pred_fallthru
      _
    // Predicated region
    $region10: #{tpu_custom_call.1} parent=1 // pred_check
      _
    $region11: #{tpu_custom_call.1} parent=1 // pred_check_branch
      %33 = sbr.rel (0) target = $region13
    $region12: #{tpu_custom_call.1} parent=1 // pred_region
      %35 = dma.done [#allocation3], 128
    $region13: #{tpu_custom_call.1} parent=1 // pred_fallthru
      _
    // Predicated region
    $region14: #{tpu_custom_call.1} parent=1 // pred_check
      _
    $region15: #{tpu_custom_call.1} parent=1 // pred_check_branch
      %37 = sbr.rel (0) target = $region17
    $region16: #{tpu_custom_call.1} parent=1 // pred_region
      %39 = dma.done [#allocation6], 128
    $region17: #{tpu_custom_call.1} parent=1 // pred_fallthru
      _
    %v40 = vld [vmem:[#allocation2] sm:$0xff]
    %v41 = vld [vmem:[#allocation5] sm:$0xff]
    %vm42 = vcmask 261120
    %v43 = vsel %vm42, %v40, -inf
    %44 = vmax.xlane.f32.xlu0 %v43
    %v45 = vpop.xlane.xlu0 %44
    %v46 = vsub.f32 %v40, %v45
    %v47 = vmul.f32 %v46, 1.442695
    %v48 = vpow.pop %v47
    %v49 = vsel %vm42, %v48, 0.0
    %50 = vadd.xlane.f32.xlu0 %v49
    %v51 = vpop.xlane.xlu0 %50
    %v52 = vlog2.pop %v51
    %v53 = vmul.f32 %v52, 0.6931472
    %v54 = vsel %vm42, %v41, 0.0
    %55 = vadd.xlane.f32.xlu0 %v54
    %v56 = vpop.xlane.xlu0 %55
    %v57 = vmul.f32 %v41, %v46
    %v58 = vsel %vm42, %v57, 0.0
    %59 = vadd.xlane.f32.xlu0 %v58
    %v60 = vpop.xlane.xlu0 %59
    %v61 = vmul.f32 %v56, %v53
    %v62 = vsub.f32 %v61, %v60
    %63 = vxpose.xlu0.b32.start [1/16] %v62, 128
    %64 = vxpose.xlu0.b32.cont [2/16] 0.0, 128
    %65 = vxpose.xlu0.b32.cont [3/16] 0.0, 128
    %66 = vxpose.xlu0.b32.cont [4/16] 0.0, 128
    %67 = vxpose.xlu0.b32.cont [5/16] 0.0, 128
    %68 = vxpose.xlu0.b32.cont [6/16] 0.0, 128
    %69 = vxpose.xlu0.b32.cont [7/16] 0.0, 128
    %70 = vxpose.xlu0.b32.cont [8/16] 0.0, 128
    %71 = vxpose.xlu0.b32.cont [9/16] 0.0, 128
    %72 = vxpose.xlu0.b32.cont [10/16] 0.0, 128
    %73 = vxpose.xlu0.b32.cont [11/16] 0.0, 128
    %74 = vxpose.xlu0.b32.cont [12/16] 0.0, 128
    %75 = vxpose.xlu0.b32.cont [13/16] 0.0, 128
    %76 = vxpose.xlu0.b32.cont [14/16] 0.0, 128
    %77 = vxpose.xlu0.b32.cont [15/16] 0.0, 128
    %78 = vxpose.xlu0.b32.end [16/16] 0.0, 128
    %v79 = vpop.trf.xlu0
    %v80 = vpop.trf.xlu0
    %v81 = vpop.trf.xlu0
    %v82 = vpop.trf.xlu0
    %v83 = vpop.trf.xlu0
    %v84 = vpop.trf.xlu0
    %v85 = vpop.trf.xlu0
    %v86 = vpop.trf.xlu0
    %v87 = vpop.trf.xlu0
    %v88 = vpop.trf.xlu0
    %v89 = vpop.trf.xlu0
    %v90 = vpop.trf.xlu0
    %v91 = vpop.trf.xlu0
    %v92 = vpop.trf.xlu0
    %v93 = vpop.trf.xlu0
    %v94 = vpop.trf.xlu0
    %vm95 = vcmask 57344
    %96 = vst.msk [vmem:[#allocation7] sm:$0x1] %vm95, %v79
    // Predicated region
    $region18: #{tpu_custom_call.1} parent=1 // pred_check
      _
    $region19: #{tpu_custom_call.1} parent=1 // pred_check_branch
      %98 = sbr.rel (0) target = $region21
    $region20: #{tpu_custom_call.1} parent=1 // pred_region
      %100 = vsyncadd [#allocation4], 0
      %s102 = sshll.u32 [#allocation7], 4
      %s103 = int_to_ptr.vmem [resolvable:$true] %s102
      %s104 = sshll.u32 %s2, 4
      %s105 = int_to_ptr.hbm [resolvable:$true] %s104
      %107 = dma.vmem_to_hbm [thread:$0]  %s103, 16, %s105, [#allocation4]
    $region21: #{tpu_custom_call.1} parent=1 // pred_fallthru
      _
    // Predicated region
    $region22: #{tpu_custom_call.1} parent=1 // pred_check
      _
    $region23: #{tpu_custom_call.1} parent=1 // pred_check_branch
      %109 = sbr.rel (0) target = $region25
    $region24: #{tpu_custom_call.1} parent=1 // pred_region
      %111 = dma.done [#allocation4], 16
    $region25: #{tpu_custom_call.1} parent=1 // pred_fallthru
      _
    %112 = vsyncpa [#allocation3], 1
    %113 = vsyncpa [#allocation6], 1
    %114 = vsyncpa [#allocation4], 1

</llo_original>
